<compile_context>
chip_gen: v5e
topology: v5e:2x2
jax: 0.10.0
libtpu: 0.0.40
codegen_flags: <defaults>
</compile_context>

<pallas_src>
import jax
import jax.numpy as jnp
from jax.experimental import pallas as pl
from jax.experimental.pallas import tpu as pltpu

_MIB = 1 << 20


# ---------------------------------------------------------------------------
# Chip-aware tiling policy
# ---------------------------------------------------------------------------
def _chip_params():
    """Per-generation (per-buffer tile budget, vmem_limit_bytes, multi_tc)."""
    kind = ""
    try:
        kind = jax.devices()[0].device_kind.lower()
    except Exception:
        pass
    vmem_cap = None
    try:
        vmem_cap = int(pltpu.get_tpu_info().vmem_capacity_bytes)
    except Exception:
        pass

    if "v7" in kind or (vmem_cap is not None and vmem_cap <= 80 * _MIB):
        # v7x: 3.2 TB/s HBM but only 64 MiB physical VMEM, 2 TensorCores.
        buf_bytes, vmem_limit, multi_tc = 12 * _MIB, 48 * _MIB, True
    elif "v5 lite" in kind or "v5e" in kind or "v5lite" in kind:
        # v5e: 16 MiB scoped-VMEM default, slowest HBM -> smaller tiles suffice.
        buf_bytes, vmem_limit, multi_tc = 6 * _MIB, 32 * _MIB, False
    else:
        # v6e (or unknown): 128 MiB physical VMEM, ~1.4 TB/s HBM.
        buf_bytes, vmem_limit, multi_tc = 12 * _MIB, 64 * _MIB, False

    if vmem_cap is not None:
        vmem_limit = min(vmem_limit, (vmem_cap * 3) // 4)
    return buf_bytes, vmem_limit, multi_tc


def _pick_tiles(rows, hw, itemsize, buf_bytes, hw_tile=None):
    """Pick (row_tile, hw_tile); one buffer stays <= buf_bytes (x2 pipelined)."""
    # Row tile: full rows when small (full-extent block), else a multiple of 8.
    tr = rows if rows <= 256 else 256

    if hw_tile is not None:
        return tr, min(hw_tile, hw)
    if hw <= 128:
        return tr, hw

    # Lane tile: multiple of 128 (unmasked vst / full-width DMA), as large as
    # the per-buffer budget allows, capped at 8192 lanes.
    cap = (buf_bytes // (tr * itemsize)) // 128 * 128
    cap = max(128, min(cap, 8192))
    if hw <= cap:
        return tr, hw

    # Prefer a tile that divides HW exactly (HW 128-aligned) so the ragged-tile
    # mask is statically compiled out and every tile is full-width.
    if hw % 128 == 0:
        nseg = hw // 128
        for k in range(cap // 128, 0, -1):
            if nseg % k == 0:
                cand = k * 128
                if cand >= min(512, cap):
                    return tr, cand
                break
    return tr, cap


# ---------------------------------------------------------------------------
# Kernels
# ---------------------------------------------------------------------------
def _make_reduce_kernel(hw, thw, num_t):
    """Sum over the HW (lane) axis of a (rows, HW) slab, tile by tile."""
    last = num_t - 1
    tail = hw - last * thw              # valid lanes in the final tile
    needs_mask = (hw % thw) != 0        # static

    if num_t == 1:
        # Whole HW in one tile: reduce directly, no resident accumulator.
        def reduce_kernel(x_ref, sum_ref, acc_ref):
            del acc_ref
            x = x_ref[...].astype(jnp.float32)
            sum_ref[...] = jnp.sum(x, axis=-1, keepdims=True)
        return reduce_kernel

    nseg = thw // 128                   # thw is a multiple of 128 when tiled

    def _lane_partial(x):               # (tr, thw) -> (tr, 128); VPU adds only,
        acc = x[:, 0:128]               # lane-aligned static slices (no XLU).
        for j in range(1, nseg):
            acc = acc + x[:, j * 128:(j + 1) * 128]
        return acc

    def reduce_kernel(x_ref, sum_ref, acc_ref):
        t = pl.program_id(1)

        @pl.when(t == 0)
        def _():
            acc_ref[...] = jnp.zeros_like(acc_ref)

        x = x_ref[...].astype(jnp.float32)              # (tr, thw), f32 accum

        if needs_mask:
            # Full tiles: plain unmasked adds.
            @pl.when(t < last)
            def _():
                acc_ref[...] += _lane_partial(x)

            # Only the ragged final tile pays for the iota/compare/select mask
            # (the mask must stay on this tile: lanes >= tail hold OOB garbage).
            @pl.when(t == last)
            def _():
                lane = jax.lax.broadcasted_iota(jnp.int32, x.shape, 1)
                acc_ref[...] += _lane_partial(jnp.where(lane < tail, x, 0.0))
        else:
            acc_ref[...] += _lane_partial(x)

        # Single cross-lane (XLU) reduce + narrow store, once per row block.
        @pl.when(t == last)
        def _():
            sum_ref[...] = jnp.sum(acc_ref[...], axis=-1, keepdims=True)

    return reduce_kernel


def _broadcast_kernel(y_ref, o_ref):
    # y_ref: (tr, 1) -> broadcast along lanes into a lane-dense (tr, thw) store.
    o_ref[...] = jnp.broadcast_to(y_ref[...], o_ref.shape).astype(o_ref.dtype)


# ---------------------------------------------------------------------------
# Reference / XLA fallback
# ---------------------------------------------------------------------------
def _reference(x, conv_weight, bn_gamma, bn_beta, bn_mean, bn_var, eps=1e-5):
    N, Cin, H, W = x.shape
    Cout = conv_weight.shape[0]
    pooled = jnp.mean(x, axis=(2, 3))                              # (N, Cin)
    conv = pooled @ conv_weight.reshape(Cout, Cin).T               # (N, Cout)
    bn = (conv - bn_mean) / jnp.sqrt(bn_var + eps) * bn_gamma + bn_beta
    y = jnp.maximum(bn, 0.0)
    return jnp.broadcast_to(y[:, :, None, None], (N, Cout, H, W)).astype(x.dtype)


# ---------------------------------------------------------------------------
# Wrapper
# ---------------------------------------------------------------------------
def global_pooling(x, conv_weight, bn_gamma, bn_beta, bn_mean, bn_var,
                   eps=1e-5, force_pallas=False, hw_tile=None):
    """x: [N, Cin, H, W] (NCHW).  conv_weight: [Cout, Cin, 1, 1]."""
    N, Cin, H, W = x.shape
    Cout = conv_weight.shape[0]
    HW = H * W

    # Small problems (per-step overhead dominates) and narrow spatial maps
    # (HW < 128 would force masked sub-lane-width stores): let XLA fuse
    # mean -> matmul -> broadcast instead.
    if not force_pallas and ((N * Cin + N * Cout) * HW < (1 << 20) or HW < 128):
        return _reference(x, conv_weight, bn_gamma, bn_beta, bn_mean, bn_var, eps)

    # Fold eval-mode BatchNorm *and* the 1/HW mean normalization into the
    # bias-free 1x1 conv:
    #   ReLU(BN(W @ (sum(x)/HW))) = ReLU((scale*W/HW) @ sum(x) + (beta - scale*mean))
    scale = (bn_gamma / jnp.sqrt(bn_var + eps)).astype(jnp.float32)            # (Cout,)
    w_eff = (conv_weight.reshape(Cout, Cin).astype(jnp.float32)
             * scale[:, None] * (1.0 / HW))                                    # (Cout, Cin)
    b_eff = (bn_beta - bn_mean * scale).astype(jnp.float32)                    # (Cout,)

    itemsize = jnp.dtype(x.dtype).itemsize
    buf_bytes, vmem_limit, multi_tc = _chip_params()
    row_sem = (getattr(pltpu, "CORE_PARALLEL", pltpu.PARALLEL)
               if multi_tc else pltpu.PARALLEL)

    # ---- Pass A: spatial sum over HW (mem-bound read pass) ----
    rows_in = N * Cin
    x_slab = x.reshape(rows_in, HW)                      # free reshape of NCHW
    tr_a, thw_a = _pick_tiles(rows_in, HW, itemsize, buf_bytes, hw_tile=hw_tile)
    if thw_a < HW:
        assert thw_a % 128 == 0, "hw_tile must be a multiple of 128 when < H*W"
    num_t_a = pl.cdiv(HW, thw_a)

    sums = pl.pallas_call(
        _make_reduce_kernel(HW, thw_a, num_t_a),
        out_shape=jax.ShapeDtypeStruct((rows_in, 1), jnp.float32),
        grid_spec=pltpu.PrefetchScalarGridSpec(
            num_scalar_prefetch=0,
            grid=(pl.cdiv(rows_in, tr_a), num_t_a),
            in_specs=[pl.BlockSpec((tr_a, thw_a), lambda r, t: (r, t))],
            out_specs=pl.BlockSpec((tr_a, 1), lambda r, t: (r, 0)),
            scratch_shapes=[pltpu.VMEM((tr_a, 128), jnp.float32)],
        ),
        compiler_params=pltpu.CompilerParams(
            dimension_semantics=(row_sem, pltpu.ARBITRARY),
            vmem_limit_bytes=vmem_limit),
    )(x_slab)

    # ---- Tiny conv + BN + ReLU, hoisted out of the hot loops ----
    y = jnp.maximum(sums.reshape(N, Cin) @ w_eff.T + b_eff, 0.0)               # (N, Cout) f32
    y_slab = y.astype(x.dtype).reshape(N * Cout, 1)

    # ---- Pass B: broadcast the 1x1 value over HW (mem-bound write pass) ----
    rows_out = N * Cout
    tr_b, thw_b = _pick_tiles(rows_out, HW, itemsize, buf_bytes, hw_tile=hw_tile)
    out_slab = pl.pallas_call(
        _broadcast_kernel,
        out_shape=jax.ShapeDtypeStruct((rows_out, HW), x.dtype),
        grid_spec=pltpu.PrefetchScalarGridSpec(
            num_scalar_prefetch=0,
            grid=(pl.cdiv(rows_out, tr_b), pl.cdiv(HW, thw_b)),
            in_specs=[pl.BlockSpec((tr_b, 1), lambda r, t: (r, 0))],
            out_specs=pl.BlockSpec((tr_b, thw_b), lambda r, t: (r, t)),
        ),
        compiler_params=pltpu.CompilerParams(
            dimension_semantics=(row_sem, pltpu.PARALLEL),
            vmem_limit_bytes=vmem_limit),
    )(y_slab)

    return out_slab.reshape(N, Cout, H, W)


# ---------------------------------------------------------------------------
# Self-test
# ---------------------------------------------------------------------------
if __name__ == "__main__":
    key = jax.random.PRNGKey(0)
    kx1, kw1, kx2, kw2, kx3, kw3 = jax.random.split(key, 6)

    Cout = 8
    bn_gamma = jnp.linspace(0.5, 1.5, Cout, dtype=jnp.float32)
    bn_beta = jnp.linspace(-0.1, 0.1, Cout, dtype=jnp.float32)
    bn_mean = jnp.linspace(-0.05, 0.05, Cout, dtype=jnp.float32)
    bn_var = jnp.linspace(0.8, 1.2, Cout, dtype=jnp.float32)

    def _check(x, w, **kw):
        out = jax.block_until_ready(
            global_pooling(x, w, bn_gamma, bn_beta, bn_mean, bn_var,
                           force_pallas=True, **kw))
        ref = _reference(x, w, bn_gamma, bn_beta, bn_mean, bn_var)
        assert out.shape == ref.shape
        assert jnp.allclose(out, ref, atol=2e-5, rtol=1e-5), "mismatch vs reference"

    # 1) Small shapes implied by the module; single-HW-tile direct-reduce path.
    x1 = jax.random.normal(kx1, (2, 4, 16, 16), dtype=jnp.float32)
    w1 = jax.random.normal(kw1, (Cout, 4, 1, 1), dtype=jnp.float32) * 0.1
    _check(x1, w1)

    # 2) Ragged HW (20*20=400) with a forced 128-lane tile: exercises the
    #    pl.when-gated masked final tile and clipped edge stores in Pass B.
    x2 = jax.random.normal(kx2, (2, 16, 20, 20), dtype=jnp.float32)
    w2 = jax.random.normal(kw2, (Cout, 16, 1, 1), dtype=jnp.float32) * 0.1
    _check(x2, w2, hw_tile=128)

    # 3) 128-aligned HW (32*32=1024) split into 4 tiles: exercises the unmasked
    #    resident-scratch accumulation path.
    x3 = jax.random.normal(kx3, (2, 8, 32, 32), dtype=jnp.float32)
    w3 = jax.random.normal(kw3, (Cout, 8, 1, 1), dtype=jnp.float32) * 0.1
    _check(x3, w3, hw_tile=256)

    print("KERNEL_OK")
</pallas_src>

<mosaic_0001>
module attributes {stable_mosaic.version = 11 : i64} {
  func.func @reduce_kernel(%arg0: i32, %arg1: i32, %arg2: memref<8x256xf32, #tpu.memory_space<vmem>>, %arg3: memref<8x1xf32, #tpu.memory_space<vmem>>, %arg4: memref<8x128xf32, #tpu.memory_space<vmem>>) attributes {dimension_semantics = [#tpu.dimension_semantics<parallel>, #tpu.dimension_semantics<arbitrary>], iteration_bounds = array<i64: 1, 1>, scalar_prefetch = 0 : i64, scratch_operands = 1 : i64, tpu.core_type = #tpu.core_type<tc>, window_params = [{transform_indices = @transform_0, window_bounds = array<i64: 8, 256>}, {transform_indices = @transform_1, window_bounds = array<i64: 8, 1>}]} {
    %c0 = arith.constant 0 : index
    %c0_0 = arith.constant 0 : index
    %0 = vector.load %arg2[%c0, %c0_0] : memref<8x256xf32, #tpu.memory_space<vmem>>, vector<8x256xf32>
    %cst = arith.constant dense<0.000000e+00> : vector<8xf32>
    %1 = vector.multi_reduction <add>, %0, %cst [1] : vector<8x256xf32> to vector<8xf32>
    %2 = vector.shape_cast %1 : vector<8xf32> to vector<8x1xf32>
    %c0_1 = arith.constant 0 : index
    %c0_2 = arith.constant 0 : index
    %3 = vector.load %arg3[%c0_1, %c0_2] : memref<8x1xf32, #tpu.memory_space<vmem>>, vector<8x1xf32>
    tpu.vector_store %arg3[%c0_1, %c0_2], %2 {strides = array<i32>} : memref<8x1xf32, #tpu.memory_space<vmem>>, vector<8x1xf32>,
    return
  }
  func.func @transform_0(%arg0: i32, %arg1: i32) -> (i32, i32) {
    %c0_i32 = arith.constant 0 : i32
    return %arg0, %arg1 : i32, i32
  }
  func.func @transform_1(%arg0: i32, %arg1: i32) -> (i32, i32) {
    %c0_i32 = arith.constant 0 : i32
    %c0_i32_0 = arith.constant 0 : i32
    return %arg0, %c0_i32 : i32, i32
  }
}

</mosaic_0001>

<llo_original>
// kernel: tpu_custom_call.1
$region0: #{tpu_custom_call.1}
  #allocation0 [shape = 'u32[]', space=smem, size = 0x4, offset = 0x4, fixed_abs, tag = 'smem constant byte address 0x4 - core index']
  #allocation1 [shape = 'u32[72,128]{1,0:T(1,128)}', space=vmem, size = 0x9000, scoped, tag = 'internal scratch']
  #allocation2 [shape = 'f32[8,128]{1,0:T(8,128)}', space=vmem, size = 0x1000, scoped, tag = 'scratch operand']
  %s0 = inlined_call_operand.hbm [shape: f32[8,256], index: 0, kind: input, shape index: {}]
  %s1 = inlined_call_operand.vmem [shape: f32[8,1], index: 1, kind: output, shape index: {}]
  %s2 = sld [smem:[#allocation0]]
  $region18: #{tpu_custom_call.1} parent=0
    _
  %s4 = ssub.s32 1, %s2
  %s5 = scalar_select 0, %s4, %s2
  $region1: #{tpu_custom_call.1} parent=0
    #allocation3 [shape = 'u8[8192]{0}', space=vmem, size = 0x2000, scoped, tag = 'input window, operand 0, single buffered']
    #allocation4 [shape = 's32[1]{0}', space=sflag, size = 0x4, scoped, tag = 'scoped memory for tpu_custom_call.1']
    %6 = vsyncpa [#allocation4], 0
    // Predicated region
    $region2: #{tpu_custom_call.1} parent=1 // pred_check
      _
    $region3: #{tpu_custom_call.1} parent=1 // pred_check_branch
      %8 = sbr.rel (0) target = $region5
    $region4: #{tpu_custom_call.1} parent=1 // pred_region
      %10 = vsyncadd [#allocation4], 0
      %s12 = sshll.u32 %s0, 4
      %s13 = int_to_ptr.hbm [resolvable:$true] %s12
      %s14 = sshll.u32 [#allocation3], 4
      %s15 = int_to_ptr.vmem [resolvable:$true] %s14
      %17 = dma.hbm_to_vmem [thread:$0]  %s13, 256, %s15, [#allocation4]
    $region5: #{tpu_custom_call.1} parent=1 // pred_fallthru
      _
    // Predicated region
    $region6: #{tpu_custom_call.1} parent=1 // pred_check
      _
    $region7: #{tpu_custom_call.1} parent=1 // pred_check_branch
      %19 = sbr.rel (0) target = $region9
    $region8: #{tpu_custom_call.1} parent=1 // pred_region
      %21 = dma.done [#allocation4], 256
    $region9: #{tpu_custom_call.1} parent=1 // pred_fallthru
      _
    %v22 = vld [vmem:[#allocation3] sm:$0xff]
    %v23 = vld [vmem:[#allocation3 + $0x8] sm:$0xff]
    %v24 = vadd.f32 %v22, %v23
    %25 = vadd.xlane.f32.xlu0 %v24
    %v26 = vpop.xlane.xlu0 %25
    %vm27 = vcmask 7168
    %28 = vst.msk [vmem:[%s1] sm:$0xff] %vm27, %v26
    // Predicated region
    $region10: #{tpu_custom_call.1} parent=1 // pred_check
      _
    $region11: #{tpu_custom_call.1} parent=1 // pred_check_branch
      %30 = sbr.rel (0) target = $region13
    $region12: #{tpu_custom_call.1} parent=1 // pred_region
      _
    $region13: #{tpu_custom_call.1} parent=1 // pred_fallthru
      _
    // Predicated region
    $region14: #{tpu_custom_call.1} parent=1 // pred_check
      _
    $region15: #{tpu_custom_call.1} parent=1 // pred_check_branch
      %32 = sbr.rel (0) target = $region17
    $region16: #{tpu_custom_call.1} parent=1 // pred_region
      _
    $region17: #{tpu_custom_call.1} parent=1 // pred_fallthru
      _
    %33 = vsyncpa [#allocation4], 1

</llo_original>
